<compile_context>
chip_gen: v7x
topology: tpu7x:2x2x1
jax: 0.10.0
libtpu: 0.0.40
codegen_flags: <defaults>
</compile_context>

<pallas_src>
import functools
import math

import jax
import jax.numpy as jnp
from jax.experimental import pallas as pl
from jax.experimental.pallas import tpu as pltpu

_VMEM_LIMIT = 32 * 1024 * 1024  # safe on v5e/v6e (128 MiB) and v7x (64 MiB physical)


def _round_up(x, m):
    return ((x + m - 1) // m) * m


def _pick_block_rows(rows):
    # Large tiles for bandwidth; small inputs collapse to a single full block.
    return min(512, _round_up(rows, 8))


def _gelu_tanh(x):
    # tanh-approximate GELU (EUP-friendly: tanh + mul/add only).
    c = math.sqrt(2.0 / math.pi)
    return 0.5 * x * (1.0 + jnp.tanh(c * (x + 0.044715 * x * x * x)))


# ----------------------------------------------------------------------------
# Kernel 1: fused ScaleNorm + Linear (+ optional GELU)
#   o = act( ScaleNorm(x) @ W + b )
# ----------------------------------------------------------------------------
def _norm_linear_kernel(scale_ref, x_ref, w_ref, b_ref, o_ref, *, eps2, use_gelu):
    x = x_ref[...].astype(jnp.float32)                       # (bm, H)
    ssq = jnp.sum(x * x, axis=-1, keepdims=True)             # (bm, 1)
    # 1/clamp(||x||, eps) == rsqrt(clamp(ssq, eps^2)); fold learnable scale in.
    inv = scale_ref[0, 0] * jax.lax.rsqrt(jnp.maximum(ssq, eps2))
    xn = x * inv                                              # ScaleNorm(x)
    y = jnp.dot(xn, w_ref[...].astype(jnp.float32),
                preferred_element_type=jnp.float32)
    y = y + b_ref[...].astype(jnp.float32)
    if use_gelu:
        y = _gelu_tanh(y)
    o_ref[...] = y.astype(o_ref.dtype)


def fused_scalenorm_linear(x2d, scale, w, b, *, eps, use_gelu=False, block_rows=None):
    rows, hidden = x2d.shape
    out_dim = w.shape[1]
    bm = block_rows or _pick_block_rows(rows)
    bm = min(bm, _round_up(rows, 8))
    grid = (pl.cdiv(rows, bm),)
    scale_smem = jnp.asarray(scale, dtype=jnp.float32).reshape(1, 1)
    b2d = b.reshape(1, out_dim)
    return pl.pallas_call(
        functools.partial(_norm_linear_kernel, eps2=float(eps) * float(eps),
                          use_gelu=use_gelu),
        out_shape=jax.ShapeDtypeStruct((rows, out_dim), x2d.dtype),
        grid=grid,
        in_specs=[
            pl.BlockSpec(memory_space=pltpu.MemorySpace.SMEM),      # scale (1,1)
            pl.BlockSpec((bm, hidden), lambda i: (i, 0)),            # x row tile
            pl.BlockSpec((hidden, out_dim), lambda i: (0, 0)),       # W (resident)
            pl.BlockSpec((1, out_dim), lambda i: (0, 0)),            # b (resident)
        ],
        out_specs=pl.BlockSpec((bm, out_dim), lambda i: (i, 0)),
        compiler_params=pltpu.CompilerParams(
            dimension_semantics=("parallel",),
            vmem_limit_bytes=_VMEM_LIMIT),
    )(scale_smem, x2d, w, b2d)


# ----------------------------------------------------------------------------
# Kernel 2: Linear + bias + residual add (epilogue fusion)
#   o = x @ W + b + residual
# ----------------------------------------------------------------------------
def _linear_residual_kernel(x_ref, w_ref, b_ref, res_ref, o_ref):
    x = x_ref[...].astype(jnp.float32)
    y = jnp.dot(x, w_ref[...].astype(jnp.float32),
                preferred_element_type=jnp.float32)
    y = y + b_ref[...].astype(jnp.float32) + res_ref[...].astype(jnp.float32)
    o_ref[...] = y.astype(o_ref.dtype)


def linear_bias_residual(x2d, w, b, res2d, *, block_rows=None):
    rows, in_dim = x2d.shape
    out_dim = w.shape[1]
    bm = block_rows or _pick_block_rows(rows)
    bm = min(bm, _round_up(rows, 8))
    grid = (pl.cdiv(rows, bm),)
    b2d = b.reshape(1, out_dim)
    return pl.pallas_call(
        _linear_residual_kernel,
        out_shape=jax.ShapeDtypeStruct((rows, out_dim), res2d.dtype),
        grid=grid,
        in_specs=[
            pl.BlockSpec((bm, in_dim), lambda i: (i, 0)),            # x row tile
            pl.BlockSpec((in_dim, out_dim), lambda i: (0, 0)),       # W (resident)
            pl.BlockSpec((1, out_dim), lambda i: (0, 0)),            # b (resident)
            pl.BlockSpec((bm, out_dim), lambda i: (i, 0)),           # residual tile
        ],
        out_specs=pl.BlockSpec((bm, out_dim), lambda i: (i, 0)),
        compiler_params=pltpu.CompilerParams(
            dimension_semantics=("parallel",),
            vmem_limit_bytes=_VMEM_LIMIT),
    )(x2d, w, b2d, res2d)


# ----------------------------------------------------------------------------
# Kernel 3: multi-head self-attention core, one (batch, head) per grid step.
#   o = softmax(q k^T * sm_scale) v     (attention_mask=None)
# ----------------------------------------------------------------------------
def _attention_kernel(q_ref, k_ref, v_ref, o_ref, *, sm_scale):
    q = q_ref[...].astype(jnp.float32)                        # (S, dh)
    k = k_ref[...].astype(jnp.float32)
    v = v_ref[...].astype(jnp.float32)
    s = jnp.dot(q, k.T, preferred_element_type=jnp.float32) * sm_scale
    s = s - jnp.max(s, axis=-1, keepdims=True)
    p = jnp.exp(s)
    p = p / jnp.sum(p, axis=-1, keepdims=True)
    o = jnp.dot(p, v, preferred_element_type=jnp.float32)
    o_ref[...] = o.astype(o_ref.dtype)


def multihead_attention(q, k, v, *, sm_scale):
    # q, k, v: (B, nh, S, dh)
    B, nh, S, dh = q.shape
    spec = pl.BlockSpec((pl.Squeezed(), pl.Squeezed(), S, dh),
                        lambda b, h: (b, h, 0, 0))
    return pl.pallas_call(
        functools.partial(_attention_kernel, sm_scale=sm_scale),
        out_shape=jax.ShapeDtypeStruct((B, nh, S, dh), q.dtype),
        grid=(B, nh),
        in_specs=[spec, spec, spec],
        out_specs=spec,
        compiler_params=pltpu.CompilerParams(
            dimension_semantics=("parallel", "parallel"),
            vmem_limit_bytes=_VMEM_LIMIT),
    )(q, k, v)


# ----------------------------------------------------------------------------
# Full TransformerLayer forward (pre-norm, eval mode, alpha = 1.0)
# ----------------------------------------------------------------------------
def transformer_layer(states, params, *, num_heads, eps=1e-5, block_rows=None):
    B, S, H = states.shape
    dh = H // num_heads
    rows = B * S
    x2d = states.reshape(rows, H)

    # --- attention sub-layer:  states + Wo @ MHA(ScaleNorm(states)) ----------
    qkv = fused_scalenorm_linear(x2d, params["norm1_scale"], params["w_qkv"],
                                 params["b_qkv"], eps=eps, block_rows=block_rows)
    qkv = qkv.reshape(B, S, 3, num_heads, dh)
    q = qkv[:, :, 0].transpose(0, 2, 1, 3)        # (B, nh, S, dh)
    k = qkv[:, :, 1].transpose(0, 2, 1, 3)
    v = qkv[:, :, 2].transpose(0, 2, 1, 3)
    ctx = multihead_attention(q, k, v, sm_scale=dh ** (-0.5))
    ctx2d = ctx.transpose(0, 2, 1, 3).reshape(rows, H)
    # TODO(synk): attention_mask is not supported (only mask=None path);
    # dropout is an identity in eval mode; deepnorm alpha fixed to 1.0.
    states2d = linear_bias_residual(ctx2d, params["w_o"], params["b_o"], x2d,
                                    block_rows=block_rows)

    # --- FFN sub-layer:  states + W2 @ GELU(W1 @ ScaleNorm(states)) ----------
    h = fused_scalenorm_linear(states2d, params["norm2_scale"], params["w1"],
                               params["b1"], eps=eps, use_gelu=True,
                               block_rows=block_rows)
    out2d = linear_bias_residual(h, params["w2"], params["b2"], states2d,
                                 block_rows=block_rows)
    return out2d.reshape(B, S, H)


# ----------------------------------------------------------------------------
# Pure-JAX reference (matches the PyTorch forward for this config)
# ----------------------------------------------------------------------------
def _scale_norm_ref(x, scale, eps):
    norm = jnp.sqrt(jnp.sum(jnp.square(x), axis=-1, keepdims=True))
    return x * scale / jnp.maximum(norm, eps)


def transformer_layer_ref(states, params, *, num_heads, eps=1e-5):
    B, S, H = states.shape
    dh = H // num_heads
    h1 = _scale_norm_ref(states, params["norm1_scale"], eps)
    qkv = h1 @ params["w_qkv"] + params["b_qkv"]
    qw, kw, vw = jnp.split(qkv, 3, axis=-1)
    def heads(t):
        return t.reshape(B, S, num_heads, dh).transpose(0, 2, 1, 3)
    q, k, v = heads(qw), heads(kw), heads(vw)
    s = jnp.einsum("bhqd,bhkd->bhqk", q, k) * dh ** (-0.5)
    p = jax.nn.softmax(s, axis=-1)
    ctx = jnp.einsum("bhqk,bhkd->bhqd", p, v)
    ctx = ctx.transpose(0, 2, 1, 3).reshape(B, S, H)
    states = states + (ctx @ params["w_o"] + params["b_o"])
    h2 = _scale_norm_ref(states, params["norm2_scale"], eps)
    ff = jax.nn.gelu(h2 @ params["w1"] + params["b1"], approximate=True)
    ff = ff @ params["w2"] + params["b2"]
    return states + ff


if __name__ == "__main__":
    # Small shapes consistent with the module: (batch, seq, hidden)
    B, S, H = 2, 8, 32
    num_heads = 4
    intermed = 64
    eps = 1e-5

    key = jax.random.PRNGKey(0)
    ks = jax.random.split(key, 8)
    states = jax.random.normal(ks[0], (B, S, H), dtype=jnp.float32)

    def init(k, shape, s=0.05):
        return (jax.random.normal(k, shape, dtype=jnp.float32) * s)

    params = dict(
        norm1_scale=jnp.float32(float(H) ** (-0.5)),   # as in ScaleNorm.__init__
        norm2_scale=jnp.float32(float(H) ** (-0.5)),
        w_qkv=init(ks[1], (H, 3 * H)),
        b_qkv=init(ks[2], (3 * H,)),
        w_o=init(ks[3], (H, H)),
        b_o=init(ks[4], (H,)),
        w1=init(ks[5], (H, intermed)),
        b1=init(ks[6], (intermed,)),
        w2=init(ks[7], (intermed, H)),
        b2=jnp.zeros((H,), jnp.float32),
    )

    out = transformer_layer(states, params, num_heads=num_heads, eps=eps)
    out = jax.block_until_ready(out)

    ref = transformer_layer_ref(states, params, num_heads=num_heads, eps=eps)
    assert out.shape == states.shape and out.dtype == states.dtype
    assert jnp.allclose(out, ref, atol=1e-4, rtol=1e-4), "mismatch vs reference"

    print("KERNEL_OK")
</pallas_src>

<mosaic_0001>
module attributes {stable_mosaic.version = 11 : i64} {
  func.func @_norm_linear_kernel(%arg0: i32, %arg1: memref<1x1xf32, #tpu.memory_space<smem>>, %arg2: memref<16x32xf32, #tpu.memory_space<vmem>>, %arg3: memref<32x96xf32, #tpu.memory_space<vmem>>, %arg4: memref<1x96xf32, #tpu.memory_space<vmem>>, %arg5: memref<16x96xf32, #tpu.memory_space<vmem>>) attributes {dimension_semantics = [#tpu.dimension_semantics<parallel>], iteration_bounds = array<i64: 1>, scalar_prefetch = 0 : i64, scratch_operands = 0 : i64, tpu.core_type = #tpu.core_type<tc>, window_params = [{transform_indices = @transform_0, window_bounds = array<i64: 1, 1>}, {transform_indices = @transform_1, window_bounds = array<i64: 16, 32>}, {pipeline_mode = #tpu.pipeline_mode<synchronous>, transform_indices = @transform_2, window_bounds = array<i64: 32, 96>}, {pipeline_mode = #tpu.pipeline_mode<synchronous>, transform_indices = @transform_3, window_bounds = array<i64: 1, 96>}, {transform_indices = @transform_4, window_bounds = array<i64: 16, 96>}]} {
    %c0 = arith.constant 0 : index
    %c0_0 = arith.constant 0 : index
    %0 = vector.load %arg2[%c0, %c0_0] : memref<16x32xf32, #tpu.memory_space<vmem>>, vector<16x32xf32>
    %1 = arith.mulf %0, %0 : vector<16x32xf32>
    %cst = arith.constant dense<0.000000e+00> : vector<16xf32>
    %2 = vector.multi_reduction <add>, %1, %cst [1] : vector<16x32xf32> to vector<16xf32>
    %3 = vector.shape_cast %2 : vector<16xf32> to vector<16x1xf32>
    %c0_1 = arith.constant 0 : index
    %c0_2 = arith.constant 0 : index
    %4 = memref.load %arg1[%c0_1, %c0_2] : memref<1x1xf32, #tpu.memory_space<smem>>
    %cst_3 = arith.constant 1.000000e-10 : f32
    %5 = vector.broadcast %cst_3 : f32 to vector<16x1xf32>
    %6 = arith.maximumf %3, %5 : vector<16x1xf32>
    %7 = math.rsqrt %6 : vector<16x1xf32>
    %8 = vector.broadcast %4 : f32 to vector<16x1xf32>
    %9 = arith.mulf %8, %7 : vector<16x1xf32>
    %10 = vector.broadcast %9 : vector<16x1xf32> to vector<16x32xf32>
    %11 = arith.mulf %0, %10 : vector<16x32xf32>
    %c0_4 = arith.constant 0 : index
    %c0_5 = arith.constant 0 : index
    %12 = vector.load %arg3[%c0_4, %c0_5] : memref<32x96xf32, #tpu.memory_space<vmem>>, vector<32x96xf32>
    %cst_6 = arith.constant dense<0.000000e+00> : vector<16x96xf32>
    %13 = tpu.matmul %11, %12, %cst_6 {dimension_numbers = #tpu.dot_dimension_numbers<[1], [0], [0], [1], [0, 0, 1, 1], [], []>} : vector<16x32xf32>, vector<32x96xf32>, vector<16x96xf32> -> vector<16x96xf32>
    %c0_7 = arith.constant 0 : index
    %c0_8 = arith.constant 0 : index
    %14 = vector.load %arg4[%c0_7, %c0_8] : memref<1x96xf32, #tpu.memory_space<vmem>>, vector<1x96xf32>
    %15 = vector.broadcast %14 : vector<1x96xf32> to vector<16x96xf32>
    %16 = arith.addf %13, %15 : vector<16x96xf32>
    %c0_9 = arith.constant 0 : index
    %c0_10 = arith.constant 0 : index
    %17 = vector.load %arg5[%c0_9, %c0_10] : memref<16x96xf32, #tpu.memory_space<vmem>>, vector<16x96xf32>
    tpu.vector_store %arg5[%c0_9, %c0_10], %16 {strides = array<i32>} : memref<16x96xf32, #tpu.memory_space<vmem>>, vector<16x96xf32>,
    return
  }
  func.func @transform_0(%arg0: i32) -> (i32, i32) {
    %c0_i32 = arith.constant 0 : i32
    %c0_i32_0 = arith.constant 0 : i32
    %c0_i32_1 = arith.constant 0 : i32
    return %c0_i32, %c0_i32_0 : i32, i32
  }
  func.func @transform_1(%arg0: i32) -> (i32, i32) {
    %c0_i32 = arith.constant 0 : i32
    %c0_i32_0 = arith.constant 0 : i32
    return %arg0, %c0_i32 : i32, i32
  }
  func.func @transform_2(%arg0: i32) -> (i32, i32) {
    %c0_i32 = arith.constant 0 : i32
    %c0_i32_0 = arith.constant 0 : i32
    %c0_i32_1 = arith.constant 0 : i32
    return %c0_i32, %c0_i32_0 : i32, i32
  }
  func.func @transform_3(%arg0: i32) -> (i32, i32) {
    %c0_i32 = arith.constant 0 : i32
    %c0_i32_0 = arith.constant 0 : i32
    %c0_i32_1 = arith.constant 0 : i32
    return %c0_i32, %c0_i32_0 : i32, i32
  }
  func.func @transform_4(%arg0: i32) -> (i32, i32) {
    %c0_i32 = arith.constant 0 : i32
    %c0_i32_0 = arith.constant 0 : i32
    return %arg0, %c0_i32 : i32, i32
  }
}

</mosaic_0001>

<llo_original>
// kernel: tpu_custom_call.1
$region0: #{tpu_custom_call.1}
  #allocation0 [shape = 'u32[]', space=smem, size = 0x4, offset = 0x4, fixed_abs, tag = 'smem constant byte address 0x4 - core index']
  #allocation1 [shape = 'u32[144,128]{1,0:T(1,128)}', space=vmem, size = 0x12000, scoped, tag = 'internal scratch']
  #allocation2 [shape = 'f32[1,1]{1,0:T(1,128)S(6)}', space=smem, size = 0x200, scoped, tag = 'scoped memory for tpu_custom_call.1']
  %s0 = inlined_call_operand.<no memory space> [shape: f32[1,1], index: 0, kind: input, shape index: {}]
  %s1 = inlined_call_operand.hbm [shape: f32[16,32], index: 1, kind: input, shape index: {}]
  %s2 = inlined_call_operand.hbm [shape: f32[32,96], index: 2, kind: input, shape index: {}]
  %s3 = inlined_call_operand.vmem [shape: f32[1,96], index: 3, kind: input, shape index: {}]
  %s4 = inlined_call_operand.hbm [shape: f32[16,96], index: 4, kind: output, shape index: {}]
  %s5 = sld [smem:[#allocation0]]
  $region34: #{tpu_custom_call.1} parent=0
    _
  %s7 = ssub.s32 1, %s5
  %s8 = scalar_select 0, %s7, %s5
  %9 = sst [smem:[#allocation2]] %s0
  $region1: #{tpu_custom_call.1} parent=0
    #allocation3 [shape = 'u8[8192]{0}', space=vmem, size = 0x2000, scoped, tag = 'input window, operand 1, single buffered']
    #allocation4 [shape = 's32[1]{0}', space=sflag, size = 0x4, scoped, tag = 'scoped memory for tpu_custom_call.1']
    #allocation5 [shape = 's32[1]{0}', space=sflag, size = 0x4, scoped, tag = 'scoped memory for tpu_custom_call.1']
    #allocation6 [shape = 'u8[16384]{0}', space=vmem, size = 0x4000, scoped, tag = 'input window, operand 2, single buffered']
    #allocation7 [shape = 's32[1]{0}', space=sflag, size = 0x4, scoped, tag = 'scoped memory for tpu_custom_call.1']
    #allocation8 [shape = 'u8[8192]{0}', space=vmem, size = 0x2000, scoped, tag = 'output window, operand 0, single buffered']
    %10 = vsyncpa [#allocation4], 0
    %11 = vsyncpa [#allocation7], 0
    %12 = vsyncpa [#allocation5], 0
    // Predicated region
    $region2: #{tpu_custom_call.1} parent=1 // pred_check
      _
    $region3: #{tpu_custom_call.1} parent=1 // pred_check_branch
      %14 = sbr.rel (0) target = $region5
    $region4: #{tpu_custom_call.1} parent=1 // pred_region
      _
    $region5: #{tpu_custom_call.1} parent=1 // pred_fallthru
      _
    // Predicated region
    $region6: #{tpu_custom_call.1} parent=1 // pred_check
      _
    $region7: #{tpu_custom_call.1} parent=1 // pred_check_branch
      %16 = sbr.rel (0) target = $region9
    $region8: #{tpu_custom_call.1} parent=1 // pred_region
      %s18 = ssub.s32 256, 256
      %19 = vsyncadd [#allocation4], %s18
      %s20 = sshll.u32 [#allocation3], 4
      %s21 = int_to_ptr.vmem [resolvable:$true] %s20
      %26 = dma.hbm_to_vmem [thread:$0]  %s1, 256, %s21, [#allocation4], 128, 128, 8
    $region9: #{tpu_custom_call.1} parent=1 // pred_fallthru
      _
    // Predicated region
    $region10: #{tpu_custom_call.1} parent=1 // pred_check
      _
    $region11: #{tpu_custom_call.1} parent=1 // pred_check_branch
      %28 = sbr.rel (0) target = $region13
    $region12: #{tpu_custom_call.1} parent=1 // pred_region
      %s30 = ssub.s32 512, 512
      %31 = vsyncadd [#allocation7], %s30
      %s32 = sshll.u32 [#allocation6], 4
      %s33 = int_to_ptr.vmem [resolvable:$true] %s32
      %38 = dma.hbm_to_vmem [thread:$0]  %s2, 512, %s33, [#allocation7], 128, 128, 8
    $region13: #{tpu_custom_call.1} parent=1 // pred_fallthru
      _
    // Predicated region
    $region14: #{tpu_custom_call.1} parent=1 // pred_check
      _
    $region15: #{tpu_custom_call.1} parent=1 // pred_check_branch
      %40 = sbr.rel (0) target = $region17
    $region16: #{tpu_custom_call.1} parent=1 // pred_region
      _
    $region17: #{tpu_custom_call.1} parent=1 // pred_fallthru
      _
    // Predicated region
    $region18: #{tpu_custom_call.1} parent=1 // pred_check
      _
    $region19: #{tpu_custom_call.1} parent=1 // pred_check_branch
      %42 = sbr.rel (0) target = $region21
    $region20: #{tpu_custom_call.1} parent=1 // pred_region
      %43 = dma.done [#allocation4], 256
    $region21: #{tpu_custom_call.1} parent=1 // pred_fallthru
      _
    // Predicated region
    $region22: #{tpu_custom_call.1} parent=1 // pred_check
      _
    $region23: #{tpu_custom_call.1} parent=1 // pred_check_branch
      %45 = sbr.rel (0) target = $region25
    $region24: #{tpu_custom_call.1} parent=1 // pred_region
      %46 = dma.done [#allocation7], 512
    $region25: #{tpu_custom_call.1} parent=1 // pred_fallthru
      _
    %v47 = vld [vmem:[#allocation3] sm:$0xff]
    %v48 = vld [vmem:[#allocation3 + $0x8] sm:$0xff]
    %v49 = vmul.f32 %v47, %v47
    %v50 = vmul.f32 %v48, %v48
    %vm51 = vcmask 261120
    %v52 = vsel %vm51, %v49, 0.0
    %53 = vadd.xlane.f32.xlu0 %v52
    %v54 = vpop.xlane.xlu0 %53
    %v55 = vsel %vm51, %v50, 0.0
    %56 = vadd.xlane.f32.xlu0 %v55
    %v57 = vpop.xlane.xlu0 %56
    %s58 = sld [smem:[#allocation2]]
    %v59 = vmax.f32 %v54, 1e-10
    %v60 = vmax.f32 %v57, 1e-10
    %v61 = vrsqrt.pop %v59
    %v62 = vrsqrt.pop %v60
    %v63 = vstv %s58
    %v64 = vmul.f32 %v63, %v61
    %v65 = vmul.f32 %v63, %v62
    %v66 = vmul.f32 %v47, %v64
    %v67 = vmul.f32 %v48, %v65
    %v68 = vld [vmem:[#allocation6] sm:$0xff]
    %v69 = vld [vmem:[#allocation6 + $0x8] sm:$0xff]
    %v70 = vld [vmem:[#allocation6 + $0x10] sm:$0xff]
    %v71 = vld [vmem:[#allocation6 + $0x18] sm:$0xff]
    %v72 = vld [vmem:[%s3] sm:$0x1]
    %v74 = vlaneseq
    %v75 = vshrl.u32 %v74, 7
    %v76 = vsub.s32 0, %v75
    %v77 = vrot.slane %v72, %v76
    %v80 = vsel %vm51, %v66, 0
    %v83 = vsel %vm51, %v67, 0
    %85 = vmatprep.subr.mxu0 0.0
    %86 = vmatpush1.msra.mxu0 %v68
    %87 = vmatprep.subr.mxu0 0.0
    %88 = vmatpush1.msra.mxu0 %v69
    %89 = vmatprep.subr.mxu0 0.0
    %90 = vmatpush1.msra.mxu0 %v70
    %91 = vmatprep.subr.mxu0 0.0
    %92 = vmatpush1.msra.mxu0 %v71
    %93 = vmatprep.subr.mxu0 0.0
    %94 = vmatpush1.msra.mxu0 0.0
    %95 = vmatprep.subr.mxu0 0.0
    %96 = vmatpush1.msra.mxu0 0.0
    %97 = vmatprep.subr.mxu0 0.0
    %98 = vmatpush1.msra.mxu0 0.0
    %99 = vmatprep.subr.mxu0 0.0
    %100 = vmatpush1.msra.mxu0 0.0
    %101 = vmatprep.subr.mxu0 0.0
    %102 = vmatpush1.msra.mxu0 0.0
    %103 = vmatprep.subr.mxu0 0.0
    %104 = vmatpush1.msra.mxu0 0.0
    %105 = vmatprep.subr.mxu0 0.0
    %106 = vmatpush1.msra.mxu0 0.0
    %107 = vmatprep.subr.mxu0 0.0
    %108 = vmatpush1.msra.mxu0 0.0
    %109 = vmatprep.subr.mxu0 0.0
    %110 = vmatpush1.msra.mxu0 0.0
    %111 = vmatprep.subr.mxu0 0.0
    %112 = vmatpush1.msra.mxu0 0.0
    %113 = vmatprep.subr.mxu0 0.0
    %114 = vmatpush1.msra.mxu0 0.0
    %115 = vmatprep.subr.mxu0 0.0
    %116 = vmatpush1.msra.mxu0 0.0
    %117 = vmatprep.subr.mxu0 0.0
    %118 = vmatpush1.msra.mxu0 0.0
    %119 = vmatprep.subr.mxu0 0.0
    %120 = vmatpush1.msra.mxu0 0.0
    %121 = vmatprep.subr.mxu0 0.0
    %122 = vmatpush1.msra.mxu0 0.0
    %123 = vmatprep.subr.mxu0 0.0
    %124 = vmatpush1.msra.mxu0 0.0
    %125 = vmatprep.subr.mxu0 0.0
    %126 = vmatpush1.msra.mxu0 0.0
    %127 = vmatprep.subr.mxu0 0.0
    %128 = vmatpush1.msra.mxu0 0.0
    %129 = vmatprep.subr.mxu0 0.0
    %130 = vmatpush1.msra.mxu0 0.0
    %131 = vmatprep.subr.mxu0 0.0
    %132 = vmatpush1.msra.mxu0 0.0
    %133 = vmatprep.subr.mxu0 0.0
    %134 = vmatpush1.msra.mxu0 0.0
    %135 = vmatprep.subr.mxu0 0.0
    %136 = vmatpush1.msra.mxu0 0.0
    %137 = vmatprep.subr.mxu0 0.0
    %138 = vmatpush1.msra.mxu0 0.0
    %139 = vmatprep.subr.mxu0 0.0
    %140 = vmatpush1.msra.mxu0 0.0
    %141 = vmatprep.subr.mxu0 0.0
    %142 = vmatpush1.msra.mxu0 0.0
    %143 = vmatprep.subr.mxu0 0.0
    %144 = vmatpush1.msra.mxu0 0.0
    %145 = vmatprep.subr.mxu0 0.0
    %146 = vmatpush1.msra.mxu0 0.0
    %147 = vmatprep.subr.mxu0 0.0
    %148 = vmatpush1.msra.mxu0 0.0
    %149 = vmatprep.mubr.f32.mxu0 0.0
    %150 = vmatmul.mubr.f32.gmra.mrb[0].mxu0 %v80
    %v151 = vpop.f32.mrb[0].mxu0
    %v152 = vadd.f32 %v77, %v151
    %v153 = vpop.f32.mrb[0].mxu0
    %154 = vmatprep.mubr.f32.mxu0 0.0
    %155 = vmatmul.mubr.f32.gmra.mrb[0].mxu0 %v83
    %v156 = vpop.f32.mrb[0].mxu0
    %v157 = vadd.f32 %v77, %v156
    %v158 = vpop.f32.mrb[0].mxu0
    %159 = vdwg.mxu0
    %vm160 = vcmask 785408
    %161 = vst.msk [vmem:[#allocation8] sm:$0xff] %vm160, %v152
    %162 = vst.msk [vmem:[#allocation8 + $0x8] sm:$0xff] %vm160, %v157
    // Predicated region
    $region26: #{tpu_custom_call.1} parent=1 // pred_check
      _
    $region27: #{tpu_custom_call.1} parent=1 // pred_check_branch
      %164 = sbr.rel (0) target = $region29
    $region28: #{tpu_custom_call.1} parent=1 // pred_region
      %s166 = ssub.s32 256, 256
      %167 = vsyncadd [#allocation5], %s166
      %s168 = sshll.u32 [#allocation8], 4
      %s169 = int_to_ptr.vmem [resolvable:$true] %s168
      %174 = dma.vmem_to_hbm [thread:$0]  %s169, 256, %s4, [#allocation5], 128, 128, 8
    $region29: #{tpu_custom_call.1} parent=1 // pred_fallthru
      _
    // Predicated region
    $region30: #{tpu_custom_call.1} parent=1 // pred_check
      _
    $region31: #{tpu_custom_call.1} parent=1 // pred_check_branch
      %176 = sbr.rel (0) target = $region33
    $region32: #{tpu_custom_call.1} parent=1 // pred_region
      %177 = dma.done [#allocation5], 256
    $region33: #{tpu_custom_call.1} parent=1 // pred_fallthru
      _
    %178 = vsyncpa [#allocation4], 1
    %179 = vsyncpa [#allocation7], 1
    %180 = vsyncpa [#allocation5], 1

</llo_original>
